<compile_context>
chip_gen: v7x
topology: tpu7x:2x2x1
jax: 0.10.0
libtpu: 0.0.40
codegen_flags: <defaults>
</compile_context>

<pallas_src>
import jax
import jax.numpy as jnp
from jax.experimental import pallas as pl
from jax.experimental.pallas import tpu as pltpu


def _classification_kernel(xl_ref, xr_ref, xd_ref, wl_ref, wr_ref, wd_ref,
                           b_ref, o_ref):
    # Three K-split MXU dots accumulated in f32 == cat([xL,xR,demo],1) @ W.T,
    # then a broadcast bias add on the VPU (free under the MXU dots).
    acc = jnp.dot(xl_ref[...], wl_ref[...], preferred_element_type=jnp.float32)
    acc = acc + jnp.dot(xr_ref[...], wr_ref[...],
                        preferred_element_type=jnp.float32)
    acc = acc + jnp.dot(xd_ref[...], wd_ref[...],
                        preferred_element_type=jnp.float32)
    o_ref[...] = (acc + b_ref[...]).astype(o_ref.dtype)


def prepare_classification_params(weight, bias, f_left, f_right, f_demo):
    """One-time split of nn.Linear(F_total, C) params (call at load time).

    weight: (C, F_total) PyTorch layout; columns ordered in the module's
            concat order [xL, xR, demographic].
    bias:   (C,)
    Returns (wL, wR, wD, bias2d): wX = (F_x, C) slices of weight.T, bias as
    (1, C).  Transpose/split happens exactly once, never per forward.
    """
    C, F_total = weight.shape
    assert f_left + f_right + f_demo == F_total
    w_t = weight.T.astype(jnp.float32)                 # (F_total, C)
    wL = w_t[:f_left]                                  # (F_L, C)
    wR = w_t[f_left:f_left + f_right]                  # (F_R, C)
    wD = w_t[f_left + f_right:]                        # (F_D, C)
    bias2d = bias.reshape(1, C).astype(jnp.float32)    # (1, C)
    return wL, wR, wD, bias2d


def classification_for_right_path(xR, xL, demographic, wL, wR, wD, bias2d,
                                  tile_b=4096):
    """Forward pass of Classification_for_right_path.

    xR:          (B, F_R)  right-path features (the module's forward arg)
    xL:          (B, F_L)  captured left-path features
    demographic: (B, F_D)  captured demographic features
    wL/wR/wD:    (F_x, C)  pre-split weight.T slices (concat order L, R, D)
    bias2d:      (1, C)
    returns:     (B, C) float32 logits

    Small B (<= tile_b): single full-array block, no padding, no slicing —
    the pallas_call is the only device op.  Large B: batch grid with
    "parallel" semantics (>= 2 tiles, so v7x can shard across both
    TensorCores); a 4096-row f32 tile is ~1.2 MB in + 64 KB out,
    comfortably inside even v7x's 32 MiB scoped-VMEM default.
    """
    B = xR.shape[0]
    FL, C = wL.shape
    FR = wR.shape[0]
    FD = wD.shape[0]
    assert xL.shape == (B, FL)
    assert xR.shape == (B, FR)
    assert demographic.shape == (B, FD)

    if B <= tile_b:
        tb = B
        pad = 0
    else:
        tb = tile_b
        pad = (-B) % tb
        if pad:
            xL = jnp.pad(xL, ((0, pad), (0, 0)))
            xR = jnp.pad(xR, ((0, pad), (0, 0)))
            demographic = jnp.pad(demographic, ((0, pad), (0, 0)))
    B_p = B + pad
    grid = (B_p // tb,)

    F_total = FL + FR + FD
    cost = pl.CostEstimate(
        flops=2 * B_p * F_total * C + B_p * C,
        transcendentals=0,
        bytes_accessed=4 * (B_p * F_total + F_total * C + C + B_p * C),
    )

    out = pl.pallas_call(
        _classification_kernel,
        out_shape=jax.ShapeDtypeStruct((B_p, C), jnp.float32),
        grid=grid,
        in_specs=[
            # Activations: tiled along batch, pipelined across the grid.
            pl.BlockSpec((tb, FL), lambda i: (i, 0)),
            pl.BlockSpec((tb, FR), lambda i: (i, 0)),
            pl.BlockSpec((tb, FD), lambda i: (i, 0)),
            # Weights/bias: constant block index -> resident in VMEM across
            # all batch tiles (tiny, ~(F_total+1)*C*4 bytes).
            pl.BlockSpec((FL, C), lambda i: (0, 0)),
            pl.BlockSpec((FR, C), lambda i: (0, 0)),
            pl.BlockSpec((FD, C), lambda i: (0, 0)),
            pl.BlockSpec((1, C), lambda i: (0, 0)),
        ],
        # Unpadded, full-dim class axis: no 128-wide lane padding, no wrapper
        # slice on the class axis.
        out_specs=pl.BlockSpec((tb, C), lambda i: (i, 0)),
        compiler_params=pltpu.CompilerParams(
            dimension_semantics=("parallel",)),
        cost_estimate=cost,
    )(xL, xR, demographic, wL, wR, wD, bias2d)

    return out if pad == 0 else out[:B]


if __name__ == "__main__":
    key = jax.random.PRNGKey(0)
    k_xl, k_xr, k_demo, k_w, k_b = jax.random.split(key, 5)

    # Small, module-consistent shapes: gradcam-style batch=2, left/right
    # feature vectors of 32, demographic of 8, 4 output classes.
    B, FL, FR, FD, C = 2, 32, 32, 8, 4
    F_total = FL + FR + FD

    xL = jax.random.normal(k_xl, (B, FL), dtype=jnp.float32)
    xR = jax.random.normal(k_xr, (B, FR), dtype=jnp.float32)
    demographic = jax.random.normal(k_demo, (B, FD), dtype=jnp.float32)

    # Deterministic synthetic nn.Linear(F_total, C) parameters; weight columns
    # follow the module's concat order [xL, xR, demographic].
    weight = jax.random.normal(k_w, (C, F_total), dtype=jnp.float32) * 0.05
    bias = jax.random.normal(k_b, (C,), dtype=jnp.float32) * 0.05

    # One-time parameter split (transpose + per-input slicing).
    wL, wR, wD, bias2d = prepare_classification_params(weight, bias, FL, FR, FD)
    (wL, wR, wD, bias2d) = jax.block_until_ready((wL, wR, wD, bias2d))

    out = classification_for_right_path(xR, xL, demographic, wL, wR, wD, bias2d)
    out = jax.block_until_ready(out)

    # Reference check in plain JAX (concat then linear, PyTorch order).
    ref = jnp.concatenate([xL, xR, demographic], axis=1) @ weight.T + bias
    assert out.shape == (B, C)
    assert jnp.allclose(out, ref, atol=1e-5, rtol=1e-5)

    print("KERNEL_OK")
</pallas_src>

<mosaic_0001>
module attributes {stable_mosaic.version = 11 : i64} {
  func.func @_classification_kernel(%arg0: i32, %arg1: memref<2x32xf32, #tpu.memory_space<vmem>>, %arg2: memref<2x32xf32, #tpu.memory_space<vmem>>, %arg3: memref<2x8xf32, #tpu.memory_space<vmem>>, %arg4: memref<32x4xf32, #tpu.memory_space<vmem>>, %arg5: memref<32x4xf32, #tpu.memory_space<vmem>>, %arg6: memref<8x4xf32, #tpu.memory_space<vmem>>, %arg7: memref<1x4xf32, #tpu.memory_space<vmem>>, %arg8: memref<2x4xf32, #tpu.memory_space<vmem>>) attributes {dimension_semantics = [#tpu.dimension_semantics<parallel>], iteration_bounds = array<i64: 1>, scalar_prefetch = 0 : i64, scratch_operands = 0 : i64, tpu.core_type = #tpu.core_type<tc>, window_params = [{transform_indices = @transform_0, window_bounds = array<i64: 2, 32>}, {transform_indices = @transform_1, window_bounds = array<i64: 2, 32>}, {transform_indices = @transform_2, window_bounds = array<i64: 2, 8>}, {pipeline_mode = #tpu.pipeline_mode<synchronous>, transform_indices = @transform_3, window_bounds = array<i64: 32, 4>}, {pipeline_mode = #tpu.pipeline_mode<synchronous>, transform_indices = @transform_4, window_bounds = array<i64: 32, 4>}, {pipeline_mode = #tpu.pipeline_mode<synchronous>, transform_indices = @transform_5, window_bounds = array<i64: 8, 4>}, {pipeline_mode = #tpu.pipeline_mode<synchronous>, transform_indices = @transform_6, window_bounds = array<i64: 1, 4>}, {transform_indices = @transform_7, window_bounds = array<i64: 2, 4>}]} {
    %c0 = arith.constant 0 : index
    %c0_0 = arith.constant 0 : index
    %0 = vector.load %arg1[%c0, %c0_0] : memref<2x32xf32, #tpu.memory_space<vmem>>, vector<2x32xf32>
    %c0_1 = arith.constant 0 : index
    %c0_2 = arith.constant 0 : index
    %1 = vector.load %arg4[%c0_1, %c0_2] : memref<32x4xf32, #tpu.memory_space<vmem>>, vector<32x4xf32>
    %cst = arith.constant dense<0.000000e+00> : vector<2x4xf32>
    %2 = tpu.matmul %0, %1, %cst {dimension_numbers = #tpu.dot_dimension_numbers<[1], [0], [0], [1], [0, 0, 1, 1], [], []>} : vector<2x32xf32>, vector<32x4xf32>, vector<2x4xf32> -> vector<2x4xf32>
    %c0_3 = arith.constant 0 : index
    %c0_4 = arith.constant 0 : index
    %3 = vector.load %arg2[%c0_3, %c0_4] : memref<2x32xf32, #tpu.memory_space<vmem>>, vector<2x32xf32>
    %c0_5 = arith.constant 0 : index
    %c0_6 = arith.constant 0 : index
    %4 = vector.load %arg5[%c0_5, %c0_6] : memref<32x4xf32, #tpu.memory_space<vmem>>, vector<32x4xf32>
    %cst_7 = arith.constant dense<0.000000e+00> : vector<2x4xf32>
    %5 = tpu.matmul %3, %4, %cst_7 {dimension_numbers = #tpu.dot_dimension_numbers<[1], [0], [0], [1], [0, 0, 1, 1], [], []>} : vector<2x32xf32>, vector<32x4xf32>, vector<2x4xf32> -> vector<2x4xf32>
    %6 = arith.addf %2, %5 : vector<2x4xf32>
    %c0_8 = arith.constant 0 : index
    %c0_9 = arith.constant 0 : index
    %7 = vector.load %arg3[%c0_8, %c0_9] : memref<2x8xf32, #tpu.memory_space<vmem>>, vector<2x8xf32>
    %c0_10 = arith.constant 0 : index
    %c0_11 = arith.constant 0 : index
    %8 = vector.load %arg6[%c0_10, %c0_11] : memref<8x4xf32, #tpu.memory_space<vmem>>, vector<8x4xf32>
    %cst_12 = arith.constant dense<0.000000e+00> : vector<2x4xf32>
    %9 = tpu.matmul %7, %8, %cst_12 {dimension_numbers = #tpu.dot_dimension_numbers<[1], [0], [0], [1], [0, 0, 1, 1], [], []>} : vector<2x8xf32>, vector<8x4xf32>, vector<2x4xf32> -> vector<2x4xf32>
    %10 = arith.addf %6, %9 : vector<2x4xf32>
    %c0_13 = arith.constant 0 : index
    %c0_14 = arith.constant 0 : index
    %11 = vector.load %arg7[%c0_13, %c0_14] : memref<1x4xf32, #tpu.memory_space<vmem>>, vector<1x4xf32>
    %12 = vector.broadcast %11 : vector<1x4xf32> to vector<2x4xf32>
    %13 = arith.addf %10, %12 : vector<2x4xf32>
    %c0_15 = arith.constant 0 : index
    %c0_16 = arith.constant 0 : index
    %14 = vector.load %arg8[%c0_15, %c0_16] : memref<2x4xf32, #tpu.memory_space<vmem>>, vector<2x4xf32>
    tpu.vector_store %arg8[%c0_15, %c0_16], %13 {strides = array<i32>} : memref<2x4xf32, #tpu.memory_space<vmem>>, vector<2x4xf32>,
    return
  }
  func.func @transform_0(%arg0: i32) -> (i32, i32) {
    %c0_i32 = arith.constant 0 : i32
    %c0_i32_0 = arith.constant 0 : i32
    return %arg0, %c0_i32 : i32, i32
  }
  func.func @transform_1(%arg0: i32) -> (i32, i32) {
    %c0_i32 = arith.constant 0 : i32
    %c0_i32_0 = arith.constant 0 : i32
    return %arg0, %c0_i32 : i32, i32
  }
  func.func @transform_2(%arg0: i32) -> (i32, i32) {
    %c0_i32 = arith.constant 0 : i32
    %c0_i32_0 = arith.constant 0 : i32
    return %arg0, %c0_i32 : i32, i32
  }
  func.func @transform_3(%arg0: i32) -> (i32, i32) {
    %c0_i32 = arith.constant 0 : i32
    %c0_i32_0 = arith.constant 0 : i32
    %c0_i32_1 = arith.constant 0 : i32
    return %c0_i32, %c0_i32_0 : i32, i32
  }
  func.func @transform_4(%arg0: i32) -> (i32, i32) {
    %c0_i32 = arith.constant 0 : i32
    %c0_i32_0 = arith.constant 0 : i32
    %c0_i32_1 = arith.constant 0 : i32
    return %c0_i32, %c0_i32_0 : i32, i32
  }
  func.func @transform_5(%arg0: i32) -> (i32, i32) {
    %c0_i32 = arith.constant 0 : i32
    %c0_i32_0 = arith.constant 0 : i32
    %c0_i32_1 = arith.constant 0 : i32
    return %c0_i32, %c0_i32_0 : i32, i32
  }
  func.func @transform_6(%arg0: i32) -> (i32, i32) {
    %c0_i32 = arith.constant 0 : i32
    %c0_i32_0 = arith.constant 0 : i32
    %c0_i32_1 = arith.constant 0 : i32
    return %c0_i32, %c0_i32_0 : i32, i32
  }
  func.func @transform_7(%arg0: i32) -> (i32, i32) {
    %c0_i32 = arith.constant 0 : i32
    %c0_i32_0 = arith.constant 0 : i32
    return %arg0, %c0_i32 : i32, i32
  }
}

</mosaic_0001>

<llo_original>
// kernel: tpu_custom_call.1
$region0: #{tpu_custom_call.1}
  #allocation0 [shape = 'u32[]', space=smem, size = 0x4, offset = 0x4, fixed_abs, tag = 'smem constant byte address 0x4 - core index']
  #allocation1 [shape = 'u32[144,128]{1,0:T(1,128)}', space=vmem, size = 0x12000, scoped, tag = 'internal scratch']
  %s0 = inlined_call_operand.vmem [shape: f32[2,32], index: 0, kind: input, shape index: {}]
  %s1 = inlined_call_operand.vmem [shape: f32[2,32], index: 1, kind: input, shape index: {}]
  %s2 = inlined_call_operand.vmem [shape: f32[2,8], index: 2, kind: input, shape index: {}]
  %s3 = inlined_call_operand.vmem [shape: f32[32,4], index: 3, kind: input, shape index: {}]
  %s4 = inlined_call_operand.vmem [shape: f32[32,4], index: 4, kind: input, shape index: {}]
  %s5 = inlined_call_operand.vmem [shape: f32[8,4], index: 5, kind: input, shape index: {}]
  %s6 = inlined_call_operand.vmem [shape: f32[1,4], index: 6, kind: input, shape index: {}]
  %s7 = inlined_call_operand.hbm [shape: f32[2,4], index: 7, kind: output, shape index: {}]
  %s8 = sld [smem:[#allocation0]]
  $region38: #{tpu_custom_call.1} parent=0
    _
  %s10 = ssub.s32 1, %s8
  %s11 = scalar_select 0, %s10, %s8
  $region1: #{tpu_custom_call.1} parent=0
    #allocation2 [shape = 'u8[1024]{0}', space=vmem, size = 0x400, scoped, tag = 'output window, operand 0, single buffered']
    #allocation3 [shape = 's32[1]{0}', space=sflag, size = 0x4, scoped, tag = 'scoped memory for tpu_custom_call.1']
    %12 = vsyncpa [#allocation3], 0
    // Predicated region
    $region2: #{tpu_custom_call.1} parent=1 // pred_check
      _
    $region3: #{tpu_custom_call.1} parent=1 // pred_check_branch
      %14 = sbr.rel (0) target = $region5
    $region4: #{tpu_custom_call.1} parent=1 // pred_region
      _
    $region5: #{tpu_custom_call.1} parent=1 // pred_fallthru
      _
    // Predicated region
    $region6: #{tpu_custom_call.1} parent=1 // pred_check
      _
    $region7: #{tpu_custom_call.1} parent=1 // pred_check_branch
      %16 = sbr.rel (0) target = $region9
    $region8: #{tpu_custom_call.1} parent=1 // pred_region
      _
    $region9: #{tpu_custom_call.1} parent=1 // pred_fallthru
      _
    // Predicated region
    $region10: #{tpu_custom_call.1} parent=1 // pred_check
      _
    $region11: #{tpu_custom_call.1} parent=1 // pred_check_branch
      %18 = sbr.rel (0) target = $region13
    $region12: #{tpu_custom_call.1} parent=1 // pred_region
      _
    $region13: #{tpu_custom_call.1} parent=1 // pred_fallthru
      _
    // Predicated region
    $region14: #{tpu_custom_call.1} parent=1 // pred_check
      _
    $region15: #{tpu_custom_call.1} parent=1 // pred_check_branch
      %20 = sbr.rel (0) target = $region17
    $region16: #{tpu_custom_call.1} parent=1 // pred_region
      _
    $region17: #{tpu_custom_call.1} parent=1 // pred_fallthru
      _
    // Predicated region
    $region18: #{tpu_custom_call.1} parent=1 // pred_check
      _
    $region19: #{tpu_custom_call.1} parent=1 // pred_check_branch
      %22 = sbr.rel (0) target = $region21
    $region20: #{tpu_custom_call.1} parent=1 // pred_region
      _
    $region21: #{tpu_custom_call.1} parent=1 // pred_fallthru
      _
    // Predicated region
    $region22: #{tpu_custom_call.1} parent=1 // pred_check
      _
    $region23: #{tpu_custom_call.1} parent=1 // pred_check_branch
      %24 = sbr.rel (0) target = $region25
    $region24: #{tpu_custom_call.1} parent=1 // pred_region
      _
    $region25: #{tpu_custom_call.1} parent=1 // pred_fallthru
      _
    // Predicated region
    $region26: #{tpu_custom_call.1} parent=1 // pred_check
      _
    $region27: #{tpu_custom_call.1} parent=1 // pred_check_branch
      %26 = sbr.rel (0) target = $region29
    $region28: #{tpu_custom_call.1} parent=1 // pred_region
      _
    $region29: #{tpu_custom_call.1} parent=1 // pred_fallthru
      _
    %v27 = vld [vmem:[%s0] sm:$0x3]
    %v28 = vld [vmem:[%s3] sm:$0xff]
    %v29 = vld [vmem:[%s3 + $0x8] sm:$0xff]
    %v30 = vld [vmem:[%s3 + $0x10] sm:$0xff]
    %v31 = vld [vmem:[%s3 + $0x18] sm:$0xff]
    %v32 = vld [vmem:[%s1] sm:$0x3]
    %v33 = vld [vmem:[%s4] sm:$0xff]
    %v34 = vld [vmem:[%s4 + $0x8] sm:$0xff]
    %v35 = vld [vmem:[%s4 + $0x10] sm:$0xff]
    %v36 = vld [vmem:[%s4 + $0x18] sm:$0xff]
    %vm37 = vcmask 261120
    %v39 = vsel %vm37, %v32, 0
    %41 = vmatprep.subr.mxu0 0.0
    %42 = vmatpush1.msra.mxu0 %v33
    %43 = vmatprep.subr.mxu0 0.0
    %44 = vmatpush1.msra.mxu0 %v34
    %45 = vmatprep.subr.mxu0 0.0
    %46 = vmatpush1.msra.mxu0 %v35
    %47 = vmatprep.subr.mxu0 0.0
    %48 = vmatpush1.msra.mxu0 %v36
    %49 = vmatprep.subr.mxu0 0.0
    %50 = vmatpush1.msra.mxu0 0.0
    %51 = vmatprep.subr.mxu0 0.0
    %52 = vmatpush1.msra.mxu0 0.0
    %53 = vmatprep.subr.mxu0 0.0
    %54 = vmatpush1.msra.mxu0 0.0
    %55 = vmatprep.subr.mxu0 0.0
    %56 = vmatpush1.msra.mxu0 0.0
    %57 = vmatprep.subr.mxu0 0.0
    %58 = vmatpush1.msra.mxu0 0.0
    %59 = vmatprep.subr.mxu0 0.0
    %60 = vmatpush1.msra.mxu0 0.0
    %61 = vmatprep.subr.mxu0 0.0
    %62 = vmatpush1.msra.mxu0 0.0
    %63 = vmatprep.subr.mxu0 0.0
    %64 = vmatpush1.msra.mxu0 0.0
    %65 = vmatprep.subr.mxu0 0.0
    %66 = vmatpush1.msra.mxu0 0.0
    %67 = vmatprep.subr.mxu0 0.0
    %68 = vmatpush1.msra.mxu0 0.0
    %69 = vmatprep.subr.mxu0 0.0
    %70 = vmatpush1.msra.mxu0 0.0
    %71 = vmatprep.subr.mxu0 0.0
    %72 = vmatpush1.msra.mxu0 0.0
    %73 = vmatprep.subr.mxu0 0.0
    %74 = vmatpush1.msra.mxu0 0.0
    %75 = vmatprep.subr.mxu0 0.0
    %76 = vmatpush1.msra.mxu0 0.0
    %77 = vmatprep.subr.mxu0 0.0
    %78 = vmatpush1.msra.mxu0 0.0
    %79 = vmatprep.subr.mxu0 0.0
    %80 = vmatpush1.msra.mxu0 0.0
    %81 = vmatprep.subr.mxu0 0.0
    %82 = vmatpush1.msra.mxu0 0.0
    %83 = vmatprep.subr.mxu0 0.0
    %84 = vmatpush1.msra.mxu0 0.0
    %85 = vmatprep.subr.mxu0 0.0
    %86 = vmatpush1.msra.mxu0 0.0
    %87 = vmatprep.subr.mxu0 0.0
    %88 = vmatpush1.msra.mxu0 0.0
    %89 = vmatprep.subr.mxu0 0.0
    %90 = vmatpush1.msra.mxu0 0.0
    %91 = vmatprep.subr.mxu0 0.0
    %92 = vmatpush1.msra.mxu0 0.0
    %93 = vmatprep.subr.mxu0 0.0
    %94 = vmatpush1.msra.mxu0 0.0
    %95 = vmatprep.subr.mxu0 0.0
    %96 = vmatpush1.msra.mxu0 0.0
    %97 = vmatprep.subr.mxu0 0.0
    %98 = vmatpush1.msra.mxu0 0.0
    %99 = vmatprep.subr.mxu0 0.0
    %100 = vmatpush1.msra.mxu0 0.0
    %101 = vmatprep.subr.mxu0 0.0
    %102 = vmatpush1.msra.mxu0 0.0
    %103 = vmatprep.subr.mxu0 0.0
    %104 = vmatpush1.msra.mxu0 0.0
    %105 = vmatprep.mubr.f32.mxu0 0.0
    %106 = vmatmul.mubr.f32.gmra.mrb[0].mxu0 %v39
    %v107 = vpop.f32.mrb[0].mxu0
    %v108 = vadd.f32 0.0, %v107
    %v109 = vpop.f32.mrb[0].mxu0
    %110 = vdwg.mxu0
    %v112 = vsel %vm37, %v27, 0
    %114 = vmatprep.subr.mxu0 0.0
    %115 = vmatpush1.msra.mxu0 %v28
    %116 = vmatprep.subr.mxu0 0.0
    %117 = vmatpush1.msra.mxu0 %v29
    %118 = vmatprep.subr.mxu0 0.0
    %119 = vmatpush1.msra.mxu0 %v30
    %120 = vmatprep.subr.mxu0 0.0
    %121 = vmatpush1.msra.mxu0 %v31
    %122 = vmatprep.subr.mxu0 0.0
    %123 = vmatpush1.msra.mxu0 0.0
    %124 = vmatprep.subr.mxu0 0.0
    %125 = vmatpush1.msra.mxu0 0.0
    %126 = vmatprep.subr.mxu0 0.0
    %127 = vmatpush1.msra.mxu0 0.0
    %128 = vmatprep.subr.mxu0 0.0
    %129 = vmatpush1.msra.mxu0 0.0
    %130 = vmatprep.subr.mxu0 0.0
    %131 = vmatpush1.msra.mxu0 0.0
    %132 = vmatprep.subr.mxu0 0.0
    %133 = vmatpush1.msra.mxu0 0.0
    %134 = vmatprep.subr.mxu0 0.0
    %135 = vmatpush1.msra.mxu0 0.0
    %136 = vmatprep.subr.mxu0 0.0
    %137 = vmatpush1.msra.mxu0 0.0
    %138 = vmatprep.subr.mxu0 0.0
    %139 = vmatpush1.msra.mxu0 0.0
    %140 = vmatprep.subr.mxu0 0.0
    %141 = vmatpush1.msra.mxu0 0.0
    %142 = vmatprep.subr.mxu0 0.0
    %143 = vmatpush1.msra.mxu0 0.0
    %144 = vmatprep.subr.mxu0 0.0
    %145 = vmatpush1.msra.mxu0 0.0
    %146 = vmatprep.subr.mxu0 0.0
    %147 = vmatpush1.msra.mxu0 0.0
    %148 = vmatprep.subr.mxu0 0.0
    %149 = vmatpush1.msra.mxu0 0.0
    %150 = vmatprep.subr.mxu0 0.0
    %151 = vmatpush1.msra.mxu0 0.0
    %152 = vmatprep.subr.mxu0 0.0
    %153 = vmatpush1.msra.mxu0 0.0
    %154 = vmatprep.subr.mxu0 0.0
    %155 = vmatpush1.msra.mxu0 0.0
    %156 = vmatprep.subr.mxu0 0.0
    %157 = vmatpush1.msra.mxu0 0.0
    %158 = vmatprep.subr.mxu0 0.0
    %159 = vmatpush1.msra.mxu0 0.0
    %160 = vmatprep.subr.mxu0 0.0
    %161 = vmatpush1.msra.mxu0 0.0
    %162 = vmatprep.subr.mxu0 0.0
    %163 = vmatpush1.msra.mxu0 0.0
    %164 = vmatprep.subr.mxu0 0.0
    %165 = vmatpush1.msra.mxu0 0.0
    %166 = vmatprep.subr.mxu0 0.0
    %167 = vmatpush1.msra.mxu0 0.0
    %168 = vmatprep.subr.mxu0 0.0
    %169 = vmatpush1.msra.mxu0 0.0
    %170 = vmatprep.subr.mxu0 0.0
    %171 = vmatpush1.msra.mxu0 0.0
    %172 = vmatprep.subr.mxu0 0.0
    %173 = vmatpush1.msra.mxu0 0.0
    %174 = vmatprep.subr.mxu0 0.0
    %175 = vmatpush1.msra.mxu0 0.0
    %176 = vmatprep.subr.mxu0 0.0
    %177 = vmatpush1.msra.mxu0 0.0
    %178 = vmatprep.mubr.f32.mxu0 0.0
    %179 = vmatmul.mubr.f32.gmra.mrb[0].mxu0 %v112
    %v180 = vpop.f32.mrb[0].mxu0
    %v181 = vadd.f32 %v108, %v180
    %v182 = vpop.f32.mrb[0].mxu0
    %183 = vdwg.mxu0
    %v184 = vld [vmem:[%s2] sm:$0x3]
    %v185 = vld [vmem:[%s5] sm:$0xff]
    %vm186 = vcmask 64512
    %v188 = vsel %vm186, %v184, 0
    %190 = vmatprep.subr.mxu0 0.0
    %191 = vmatpush1.msra.mxu0 %v185
    %192 = vmatprep.subr.mxu0 0.0
    %193 = vmatpush1.msra.mxu0 0.0
    %194 = vmatprep.subr.mxu0 0.0
    %195 = vmatpush1.msra.mxu0 0.0
    %196 = vmatprep.subr.mxu0 0.0
    %197 = vmatpush1.msra.mxu0 0.0
    %198 = vmatprep.subr.mxu0 0.0
    %199 = vmatpush1.msra.mxu0 0.0
    %200 = vmatprep.subr.mxu0 0.0
    %201 = vmatpush1.msra.mxu0 0.0
    %202 = vmatprep.subr.mxu0 0.0
    %203 = vmatpush1.msra.mxu0 0.0
    %204 = vmatprep.subr.mxu0 0.0
    %205 = vmatpush1.msra.mxu0 0.0
    %206 = vmatprep.subr.mxu0 0.0
    %207 = vmatpush1.msra.mxu0 0.0
    %208 = vmatprep.subr.mxu0 0.0
    %209 = vmatpush1.msra.mxu0 0.0
    %210 = vmatprep.subr.mxu0 0.0
    %211 = vmatpush1.msra.mxu0 0.0
    %212 = vmatprep.subr.mxu0 0.0
    %213 = vmatpush1.msra.mxu0 0.0
    %214 = vmatprep.subr.mxu0 0.0
    %215 = vmatpush1.msra.mxu0 0.0
    %216 = vmatprep.subr.mxu0 0.0
    %217 = vmatpush1.msra.mxu0 0.0
    %218 = vmatprep.subr.mxu0 0.0
    %219 = vmatpush1.msra.mxu0 0.0
    %220 = vmatprep.subr.mxu0 0.0
    %221 = vmatpush1.msra.mxu0 0.0
    %222 = vmatprep.subr.mxu0 0.0
    %223 = vmatpush1.msra.mxu0 0.0
    %224 = vmatprep.subr.mxu0 0.0
    %225 = vmatpush1.msra.mxu0 0.0
    %226 = vmatprep.subr.mxu0 0.0
    %227 = vmatpush1.msra.mxu0 0.0
    %228 = vmatprep.subr.mxu0 0.0
    %229 = vmatpush1.msra.mxu0 0.0
    %230 = vmatprep.subr.mxu0 0.0
    %231 = vmatpush1.msra.mxu0 0.0
    %232 = vmatprep.subr.mxu0 0.0
    %233 = vmatpush1.msra.mxu0 0.0
    %234 = vmatprep.subr.mxu0 0.0
    %235 = vmatpush1.msra.mxu0 0.0
    %236 = vmatprep.subr.mxu0 0.0
    %237 = vmatpush1.msra.mxu0 0.0
    %238 = vmatprep.subr.mxu0 0.0
    %239 = vmatpush1.msra.mxu0 0.0
    %240 = vmatprep.subr.mxu0 0.0
    %241 = vmatpush1.msra.mxu0 0.0
    %242 = vmatprep.subr.mxu0 0.0
    %243 = vmatpush1.msra.mxu0 0.0
    %244 = vmatprep.subr.mxu0 0.0
    %245 = vmatpush1.msra.mxu0 0.0
    %246 = vmatprep.subr.mxu0 0.0
    %247 = vmatpush1.msra.mxu0 0.0
    %248 = vmatprep.subr.mxu0 0.0
    %249 = vmatpush1.msra.mxu0 0.0
    %250 = vmatprep.subr.mxu0 0.0
    %251 = vmatpush1.msra.mxu0 0.0
    %252 = vmatprep.subr.mxu0 0.0
    %253 = vmatpush1.msra.mxu0 0.0
    %254 = vmatprep.mubr.f32.mxu0 0.0
    %255 = vmatmul.mubr.f32.gmra.mrb[0].mxu0 %v188
    %v256 = vpop.f32.mrb[0].mxu0
    %v257 = vadd.f32 0.0, %v256
    %v258 = vpop.f32.mrb[0].mxu0
    %259 = vdwg.mxu0
    %v260 = vadd.f32 %v181, %v257
    %v261 = vld [vmem:[%s6] sm:$0x1]
    %v263 = vlaneseq
    %v264 = vshrl.u32 %v263, 7
    %v265 = vsub.s32 0, %v264
    %v266 = vrot.slane %v261, %v265
    %v268 = vadd.f32 %v260, %v266
    %vm269 = vcmask 25600
    %270 = vst.msk [vmem:[#allocation2] sm:$0x3] %vm269, %v268
    // Predicated region
    $region30: #{tpu_custom_call.1} parent=1 // pred_check
      _
    $region31: #{tpu_custom_call.1} parent=1 // pred_check_branch
      %272 = sbr.rel (0) target = $region33
    $region32: #{tpu_custom_call.1} parent=1 // pred_region
      %s274 = ssub.s32 32, 32
      %275 = vsyncadd [#allocation3], %s274
      %s277 = sshll.u32 [#allocation2], 4
      %s278 = int_to_ptr.vmem [resolvable:$true] %s277
      %280 = dma.vmem_to_hbm [thread:$0]  %s278, 32, %s7, [#allocation3]
    $region33: #{tpu_custom_call.1} parent=1 // pred_fallthru
      _
    // Predicated region
    $region34: #{tpu_custom_call.1} parent=1 // pred_check
      _
    $region35: #{tpu_custom_call.1} parent=1 // pred_check_branch
      %282 = sbr.rel (0) target = $region37
    $region36: #{tpu_custom_call.1} parent=1 // pred_region
      %283 = dma.done [#allocation3], 32
    $region37: #{tpu_custom_call.1} parent=1 // pred_fallthru
      _
    %284 = vsyncpa [#allocation3], 1

</llo_original>
